<compile_context>
chip_gen: v6e
topology: v6e:2x2x1
jax: 0.10.0
libtpu: 0.0.40
codegen_flags: <defaults>
</compile_context>

<pallas_src>
import jax
import jax.numpy as jnp
from jax.experimental import pallas as pl
from jax.experimental.pallas import tpu as pltpu


def _spatial_attention_kernel(x_ref, wqkv_ref, bqkv_ref, adj_ref, o_ref):
    Bt, N, C_in = x_ref.shape
    C = o_ref.shape[-1]

    x = x_ref[...]                                   # (Bt, N, C_in)
    x2 = x.reshape(Bt * N, C_in)                     # fold batch into rows (layout-trivial)

    # Fused Q/K/V projection: one (Bt*N, C_in) @ (C_in, 3*C_out) matmul + one bias add.
    qkv = jnp.dot(x2, wqkv_ref[...],
                  preferred_element_type=jnp.float32) + bqkv_ref[...]
    qkv = qkv.reshape(Bt, N, 3 * C)
    q = qkv[:, :, 0 * C:1 * C]
    k = qkv[:, :, 1 * C:2 * C]
    v = qkv[:, :, 2 * C:3 * C]

    # S[b, n, m] = Q[b, n, :] . K[b, m, :]  (batched, contracts last dims; no .T)
    s = jnp.einsum('bnc,bmc->bnm', q, k, preferred_element_type=jnp.float32)

    # softmax over torch dim=1, i.e. axis 1 of the (Bt, N, N) block
    s = s - jnp.max(s, axis=1, keepdims=True)
    e = jnp.exp(s)
    denom = jnp.sum(e, axis=1, keepdims=True)
    p = e * pl.reciprocal(denom, approx=True)        # EUP vrcp, off the VALU path

    # (S @ adj) as one big (Bt*N, N) @ (N, N) matmul, then batched @ V.
    s2 = jnp.dot(p.reshape(Bt * N, N), adj_ref[...],
                 preferred_element_type=jnp.float32).reshape(Bt, N, N)
    out = jnp.einsum('bnm,bmc->bnc', s2, v, preferred_element_type=jnp.float32)

    o_ref[...] = out.astype(o_ref.dtype)


def _largest_divisor_at_most(n, cap):
    cap = max(1, min(n, int(cap)))
    for d in range(cap, 0, -1):
        if n % d == 0:
            return d
    return 1


def spatial_attention(x, wq, bq, wk, bk, wv, adj, *, block_b=None,
                      vmem_budget_bytes=32 * 1024 * 1024):
    """x: (B, N, C_in); weights (C_in, C_out) (== torch weight.T);
    bq/bk: (1, C_out); adj: (N, N).  Returns (B, N, C_out)."""
    B, N, C_in = x.shape
    C_out = wq.shape[1]
    f32 = 4

    if block_b is None:
        # Rough f32 per-batch-element footprint inside one grid step:
        # x block + qkv slab + q/k/v views + (N,N) score slabs + out block,
        # with double-buffered pipeline blocks folded in.
        per_b = N * (3 * C_in + 3 * 3 * C_out + 3 * N + 3 * C_out) * f32
        fixed = 2 * (C_in * 3 * C_out + 3 * C_out + N * N) * f32
        budget = max(vmem_budget_bytes - fixed, per_b)
        block_b = _largest_divisor_at_most(B, budget // per_b)
    else:
        block_b = _largest_divisor_at_most(B, block_b)

    # Fused projection parameters: Wqkv = [Wq | Wk | Wv], bias = [bq | bk | 0].
    wqkv = jnp.concatenate([wq, wk, wv], axis=1)                 # (C_in, 3*C_out)
    bqkv = jnp.concatenate(
        [bq, bk, jnp.zeros((1, C_out), bq.dtype)], axis=1)       # (1, 3*C_out)

    grid = (B // block_b,)

    # Explicit VMEM budget (keeps the same code safe on v7x's 64 MiB VMEM).
    est = (2 * block_b * N * (C_in + C_out) * f32                 # x/out blocks, double-buffered
           + 2 * (C_in * 3 * C_out + 3 * C_out + N * N) * f32     # params, double-buffered
           + block_b * N * (3 * 3 * C_out + 3 * N) * f32)         # live temporaries
    vmem_limit = int(min(max(2 * est, 32 * 1024 * 1024), 48 * 1024 * 1024))

    return pl.pallas_call(
        _spatial_attention_kernel,
        out_shape=jax.ShapeDtypeStruct((B, N, C_out), x.dtype),
        grid_spec=pltpu.PrefetchScalarGridSpec(
            num_scalar_prefetch=0,
            grid=grid,
            in_specs=[
                pl.BlockSpec((block_b, N, C_in), lambda i: (i, 0, 0)),   # x
                pl.BlockSpec((C_in, 3 * C_out), lambda i: (0, 0)),       # fused Wqkv
                pl.BlockSpec((1, 3 * C_out), lambda i: (0, 0)),          # fused bias
                pl.BlockSpec((N, N), lambda i: (0, 0)),                  # adj
            ],
            out_specs=pl.BlockSpec((block_b, N, C_out), lambda i: (i, 0, 0)),
        ),
        compiler_params=pltpu.CompilerParams(
            dimension_semantics=("parallel",),
            vmem_limit_bytes=vmem_limit,
        ),
    )(x, wqkv, bqkv, adj)


def _reference(x, wq, bq, wk, bk, wv, adj):
    q = x @ wq + bq
    k = x @ wk + bk
    v = x @ wv
    s = jnp.einsum("bnc,bmc->bnm", q, k)
    s = jax.nn.softmax(s, axis=1)          # torch dim=1
    s = jnp.einsum("bnm,mc->bnc", s, adj)
    return jnp.einsum("bnm,bmc->bnc", s, v)


if __name__ == "__main__":
    B, N, C_IN, C_OUT = 8, 16, 16, 32

    key = jax.random.PRNGKey(0)
    kx, kq, kbq, kk, kbk, kv, ka = jax.random.split(key, 7)

    x   = jax.random.normal(kx, (B, N, C_IN), dtype=jnp.float32)
    # deterministic parameter init (PyTorch Linear weight.T layout)
    wq  = jax.random.normal(kq,  (C_IN, C_OUT), dtype=jnp.float32) * 0.1
    bq  = jax.random.normal(kbq, (1, C_OUT),    dtype=jnp.float32) * 0.1
    wk  = jax.random.normal(kk,  (C_IN, C_OUT), dtype=jnp.float32) * 0.1
    bk  = jax.random.normal(kbk, (1, C_OUT),    dtype=jnp.float32) * 0.1
    wv  = jax.random.normal(kv,  (C_IN, C_OUT), dtype=jnp.float32) * 0.1
    adj = jax.random.normal(ka,  (N, N),        dtype=jnp.float32) * 0.1

    out = spatial_attention(x, wq, bq, wk, bk, wv, adj, block_b=4)  # grid = (2,), Bt = 4
    out = jax.block_until_ready(out)

    ref = _reference(x, wq, bq, wk, bk, wv, adj)
    assert out.shape == (B, N, C_OUT)
    # approx-reciprocal softmax denominator -> slightly looser tolerance
    assert jnp.allclose(out, ref, atol=2e-3, rtol=2e-3), "mismatch vs reference"

    print("KERNEL_OK")
</pallas_src>

<mosaic_0001>
module attributes {stable_mosaic.version = 11 : i64} {
  func.func @_spatial_attention_kernel(%arg0: i32, %arg1: memref<4x16x16xf32, #tpu.memory_space<vmem>>, %arg2: memref<16x96xf32, #tpu.memory_space<vmem>>, %arg3: memref<1x96xf32, #tpu.memory_space<vmem>>, %arg4: memref<16x16xf32, #tpu.memory_space<vmem>>, %arg5: memref<4x16x32xf32, #tpu.memory_space<vmem>>) attributes {dimension_semantics = [#tpu.dimension_semantics<parallel>], iteration_bounds = array<i64: 2>, scalar_prefetch = 0 : i64, scratch_operands = 0 : i64, tpu.core_type = #tpu.core_type<tc>, window_params = [{transform_indices = @transform_0, window_bounds = array<i64: 4, 16, 16>}, {pipeline_mode = #tpu.pipeline_mode<synchronous>, transform_indices = @transform_1, window_bounds = array<i64: 16, 96>}, {pipeline_mode = #tpu.pipeline_mode<synchronous>, transform_indices = @transform_2, window_bounds = array<i64: 1, 96>}, {pipeline_mode = #tpu.pipeline_mode<synchronous>, transform_indices = @transform_3, window_bounds = array<i64: 16, 16>}, {transform_indices = @transform_4, window_bounds = array<i64: 4, 16, 32>}]} {
    %c0 = arith.constant 0 : index
    %c0_0 = arith.constant 0 : index
    %c0_1 = arith.constant 0 : index
    %0 = vector.load %arg1[%c0, %c0_0, %c0_1] : memref<4x16x16xf32, #tpu.memory_space<vmem>>, vector<4x16x16xf32>
    %1 = vector.shape_cast %0 : vector<4x16x16xf32> to vector<64x16xf32>
    %c0_2 = arith.constant 0 : index
    %c0_3 = arith.constant 0 : index
    %2 = vector.load %arg2[%c0_2, %c0_3] : memref<16x96xf32, #tpu.memory_space<vmem>>, vector<16x96xf32>
    %cst = arith.constant dense<0.000000e+00> : vector<64x96xf32>
    %3 = tpu.matmul %1, %2, %cst {dimension_numbers = #tpu.dot_dimension_numbers<[1], [0], [0], [1], [0, 0, 1, 1], [], []>} : vector<64x16xf32>, vector<16x96xf32>, vector<64x96xf32> -> vector<64x96xf32>
    %c0_4 = arith.constant 0 : index
    %c0_5 = arith.constant 0 : index
    %4 = vector.load %arg3[%c0_4, %c0_5] : memref<1x96xf32, #tpu.memory_space<vmem>>, vector<1x96xf32>
    %5 = vector.broadcast %4 : vector<1x96xf32> to vector<64x96xf32>
    %6 = arith.addf %3, %5 : vector<64x96xf32>
    %7 = vector.shape_cast %6 : vector<64x96xf32> to vector<4x16x96xf32>
    %8 = vector.extract_strided_slice %7 {offsets = [0, 0, 0], sizes = [4, 16, 32], strides = [1, 1, 1]} : vector<4x16x96xf32> to vector<4x16x32xf32>
    %9 = vector.extract_strided_slice %7 {offsets = [0, 0, 32], sizes = [4, 16, 32], strides = [1, 1, 1]} : vector<4x16x96xf32> to vector<4x16x32xf32>
    %10 = vector.extract_strided_slice %7 {offsets = [0, 0, 64], sizes = [4, 16, 32], strides = [1, 1, 1]} : vector<4x16x96xf32> to vector<4x16x32xf32>
    "tpu.trace_start"() <{level = 10 : i32, message = "bnc,bmc->bnm"}> : () -> ()
    %cst_6 = arith.constant dense<0.000000e+00> : vector<4x16x16xf32>
    %11 = tpu.matmul %8, %9, %cst_6 {dimension_numbers = #tpu.dot_dimension_numbers<[2], [2], [1], [1], [0, 0, 0, 1, 1, 1], [0], [0]>} : vector<4x16x32xf32>, vector<4x16x32xf32>, vector<4x16x16xf32> -> vector<4x16x16xf32>
    "tpu.trace_stop"() : () -> ()
    %cst_7 = arith.constant dense<0xFF800000> : vector<4x16xf32>
    %12 = vector.multi_reduction <maximumf>, %11, %cst_7 [1] : vector<4x16x16xf32> to vector<4x16xf32>
    %13 = vector.shape_cast %12 : vector<4x16xf32> to vector<4x1x16xf32>
    %14 = vector.broadcast %13 : vector<4x1x16xf32> to vector<4x16x16xf32>
    %15 = arith.subf %11, %14 : vector<4x16x16xf32>
    %16 = math.exp %15 : vector<4x16x16xf32>
    %cst_8 = arith.constant dense<0.000000e+00> : vector<4x16xf32>
    %17 = vector.multi_reduction <add>, %16, %cst_8 [1] : vector<4x16x16xf32> to vector<4x16xf32>
    %18 = vector.shape_cast %17 : vector<4x16xf32> to vector<4x1x16xf32>
    %19 = tpu.reciprocal %18 {approx = true} : vector<4x1x16xf32> -> vector<4x1x16xf32>
    %20 = vector.broadcast %19 : vector<4x1x16xf32> to vector<4x16x16xf32>
    %21 = arith.mulf %16, %20 : vector<4x16x16xf32>
    %22 = vector.shape_cast %21 : vector<4x16x16xf32> to vector<64x16xf32>
    %c0_9 = arith.constant 0 : index
    %c0_10 = arith.constant 0 : index
    %23 = vector.load %arg4[%c0_9, %c0_10] : memref<16x16xf32, #tpu.memory_space<vmem>>, vector<16x16xf32>
    %cst_11 = arith.constant dense<0.000000e+00> : vector<64x16xf32>
    %24 = tpu.matmul %22, %23, %cst_11 {dimension_numbers = #tpu.dot_dimension_numbers<[1], [0], [0], [1], [0, 0, 1, 1], [], []>} : vector<64x16xf32>, vector<16x16xf32>, vector<64x16xf32> -> vector<64x16xf32>
    %25 = vector.shape_cast %24 : vector<64x16xf32> to vector<4x16x16xf32>
    "tpu.trace_start"() <{level = 10 : i32, message = "bnm,bmc->bnc"}> : () -> ()
    %cst_12 = arith.constant dense<0.000000e+00> : vector<4x16x32xf32>
    %26 = tpu.matmul %25, %10, %cst_12 {dimension_numbers = #tpu.dot_dimension_numbers<[2], [1], [1], [2], [0, 0, 0, 1, 1, 2], [0], [0]>} : vector<4x16x16xf32>, vector<4x16x32xf32>, vector<4x16x32xf32> -> vector<4x16x32xf32>
    "tpu.trace_stop"() : () -> ()
    %c0_13 = arith.constant 0 : index
    %c0_14 = arith.constant 0 : index
    %c0_15 = arith.constant 0 : index
    %27 = vector.load %arg5[%c0_13, %c0_14, %c0_15] : memref<4x16x32xf32, #tpu.memory_space<vmem>>, vector<4x16x32xf32>
    tpu.vector_store %arg5[%c0_13, %c0_14, %c0_15], %26 {strides = array<i32>} : memref<4x16x32xf32, #tpu.memory_space<vmem>>, vector<4x16x32xf32>,
    return
  }
  func.func @transform_0(%arg0: i32) -> (i32, i32, i32) {
    %c0_i32 = arith.constant 0 : i32
    %c0_i32_0 = arith.constant 0 : i32
    %c0_i32_1 = arith.constant 0 : i32
    return %arg0, %c0_i32, %c0_i32_0 : i32, i32, i32
  }
  func.func @transform_1(%arg0: i32) -> (i32, i32) {
    %c0_i32 = arith.constant 0 : i32
    %c0_i32_0 = arith.constant 0 : i32
    %c0_i32_1 = arith.constant 0 : i32
    return %c0_i32, %c0_i32_0 : i32, i32
  }
  func.func @transform_2(%arg0: i32) -> (i32, i32) {
    %c0_i32 = arith.constant 0 : i32
    %c0_i32_0 = arith.constant 0 : i32
    %c0_i32_1 = arith.constant 0 : i32
    return %c0_i32, %c0_i32_0 : i32, i32
  }
  func.func @transform_3(%arg0: i32) -> (i32, i32) {
    %c0_i32 = arith.constant 0 : i32
    %c0_i32_0 = arith.constant 0 : i32
    %c0_i32_1 = arith.constant 0 : i32
    return %c0_i32, %c0_i32_0 : i32, i32
  }
  func.func @transform_4(%arg0: i32) -> (i32, i32, i32) {
    %c0_i32 = arith.constant 0 : i32
    %c0_i32_0 = arith.constant 0 : i32
    %c0_i32_1 = arith.constant 0 : i32
    return %arg0, %c0_i32, %c0_i32_0 : i32, i32, i32
  }
}

</mosaic_0001>

<llo_original>
// kernel: tpu_custom_call.1
$region0: #{tpu_custom_call.1}
  #allocation0 [shape = 'u32[]', space=smem, size = 0x4, offset = 0x4, fixed_abs, tag = 'smem constant byte address 0x4 - core index']
  #allocation1 [shape = 'u32[144,128]{1,0:T(1,128)}', space=vmem, size = 0x12000, scoped, tag = 'internal scratch']
  %s0 = inlined_call_operand.hbm [shape: f32[8,16,16], index: 0, kind: input, shape index: {}]
  %s1 = inlined_call_operand.hbm [shape: f32[16,96], index: 1, kind: input, shape index: {}]
  %s2 = inlined_call_operand.vmem [shape: f32[1,96], index: 2, kind: input, shape index: {}]
  %s3 = inlined_call_operand.hbm [shape: f32[16,16], index: 3, kind: input, shape index: {}]
  %s4 = inlined_call_operand.hbm [shape: f32[8,16,32], index: 4, kind: output, shape index: {}]
  %s5 = sld [smem:[#allocation0]]
  $region61: #{tpu_custom_call.1} parent=0
    _
  %s7 = ssub.s32 1, %s5
  %s8 = scalar_select 0, %s7, %s5
  $region1: #{tpu_custom_call.1} parent=0
    #allocation2 [shape = 'u8[65536]{0}', space=vmem, size = 0x10000, scoped, tag = 'input window, operand 0']
    #allocation3 [shape = 's32[2]{0}', space=sflag, size = 0x8, scoped, tag = 'scoped memory for tpu_custom_call.1']
    #allocation4 [shape = 's32[2]{0}', space=sflag, size = 0x8, scoped, tag = 'scoped memory for tpu_custom_call.1']
    #allocation5 [shape = 'u8[8192]{0}', space=vmem, size = 0x2000, scoped, tag = 'input window, operand 1, single buffered']
    #allocation6 [shape = 's32[1]{0}', space=sflag, size = 0x4, scoped, tag = 'scoped memory for tpu_custom_call.1']
    #allocation7 [shape = 'u8[8192]{0}', space=vmem, size = 0x2000, scoped, tag = 'input window, operand 3, single buffered']
    #allocation8 [shape = 'u8[65536]{0}', space=vmem, size = 0x10000, scoped, tag = 'output window, operand 0']
    %9 = vsyncpa [#allocation3], 0
    %s10 = scalar_lea.sflag [#allocation3], 1
    %11 = vsyncpa %s10, 0
    %12 = vsyncpa [#allocation6], 0
    %13 = vsyncpa [#allocation4], 0
    %s14 = scalar_lea.sflag [#allocation4], 1
    %15 = vsyncpa %s14, 0
    loop: start=0, step=1, limit=4
    $region2: #{tpu_custom_call.1} parent=1 // loop_pre_header
      _
    $region3: #{tpu_custom_call.1} parent=1 // loop_header
      %s17 = sphi 0, %s21
      %p18 = scmp.ge.s32.totalorder %s17, 4
      %s27 = sphi 0, %s29
      %s30 = sphi 0, %s27
      %s31 = sphi 0, %s30
      %s47 = sphi 0, %s31
      %s51 = sphi 0, %s51
      %s53 = sphi 0, %s51
      %s54 = sphi 0, %s53
      %s68 = sphi 0, %s54
      %s72 = sphi 0, %s72
      %s74 = sphi 0, %s72
      %s75 = sphi 0, %s74
      %s89 = sphi 0, %s75
      %s93 = sphi 0, %s93
      %s95 = sphi 0, %s93
      %s96 = sphi 0, %s95
      %s110 = sphi 0, %s96
      %s116 = sphi 0, %s118
      %s119 = sphi 0, %s116
      %s120 = sphi 0, %s119
      %s136 = sphi 0, %s120
    $region4: #{tpu_custom_call.1} parent=1 // loop_header_branch
      %20 = sbr.rel (%p18) target = $region8
    $region5: #{tpu_custom_call.1} parent=1 // loop_body
      %s22 = ssub.s32 %s17, 1
      %s23 = ssub.s32 %s17, 2
      %s24 = sadd.s32 %s17, 1
      %s25 = ssub.s32 %s17, %s24
      %p26 = scmp.eq.s32.totalorder %s25, 0
      %s28 = sadd.s32 %s27, 1
      %s29 = scalar_select %p26, %s27, %s28
      %p32 = pneg %p26
      %p33 = scmp.eq.s32.totalorder %s17, 1
      %p34 = por %p32, %p33
      %p35 = scmp.ne.s32.totalorder %s27, %s30
      %p36 = scmp.eq.s32.totalorder %s17, 0
      %p37 = por %p35, %p36
      %p38 = scmp.ne.s32.totalorder %s27, %s30
      %p39 = scmp.eq.s32.totalorder %s22, 1
      %p40 = por %p38, %p39
      %p41 = scmp.ne.s32.totalorder %s30, %s31
      %p42 = scmp.eq.s32.totalorder %s22, 0
      %p43 = por %p41, %p42
      %p44 = scmp.ne.s32.totalorder %s30, %s31
      %p45 = scmp.eq.s32.totalorder %s23, 1
      %p46 = por %p44, %p45
      %p48 = scmp.ne.s32.totalorder %s31, %s47
      %p49 = scmp.eq.s32.totalorder %s23, 0
      %p50 = por %p48, %p49
      %s52 = sadd.s32 %s51, 1
      %p55 = scmp.eq.s32.totalorder %s17, 1
      %p56 = scmp.ne.s32.totalorder %s51, %s53
      %p57 = scmp.eq.s32.totalorder %s17, 0
      %p58 = por %p56, %p57
      %p59 = scmp.ne.s32.totalorder %s51, %s53
      %p60 = scmp.eq.s32.totalorder %s22, 1
      %p61 = por %p59, %p60
      %p62 = scmp.ne.s32.totalorder %s53, %s54
      %p63 = scmp.eq.s32.totalorder %s22, 0
      %p64 = por %p62, %p63
      %p65 = scmp.ne.s32.totalorder %s53, %s54
      %p66 = scmp.eq.s32.totalorder %s23, 1
      %p67 = por %p65, %p66
      %p69 = scmp.ne.s32.totalorder %s54, %s68
      %p70 = scmp.eq.s32.totalorder %s23, 0
      %p71 = por %p69, %p70
      %s73 = sadd.s32 %s72, 1
      %p76 = scmp.eq.s32.totalorder %s17, 1
      %p77 = scmp.ne.s32.totalorder %s72, %s74
      %p78 = scmp.eq.s32.totalorder %s17, 0
      %p79 = por %p77, %p78
      %p80 = scmp.ne.s32.totalorder %s72, %s74
      %p81 = scmp.eq.s32.totalorder %s22, 1
      %p82 = por %p80, %p81
      %p83 = scmp.ne.s32.totalorder %s74, %s75
      %p84 = scmp.eq.s32.totalorder %s22, 0
      %p85 = por %p83, %p84
      %p86 = scmp.ne.s32.totalorder %s74, %s75
      %p87 = scmp.eq.s32.totalorder %s23, 1
      %p88 = por %p86, %p87
      %p90 = scmp.ne.s32.totalorder %s75, %s89
      %p91 = scmp.eq.s32.totalorder %s23, 0
      %p92 = por %p90, %p91
      %s94 = sadd.s32 %s93, 1
      %p97 = scmp.eq.s32.totalorder %s17, 1
      %p98 = scmp.ne.s32.totalorder %s93, %s95
      %p99 = scmp.eq.s32.totalorder %s17, 0
      %p100 = por %p98, %p99
      %p101 = scmp.ne.s32.totalorder %s93, %s95
      %p102 = scmp.eq.s32.totalorder %s22, 1
      %p103 = por %p101, %p102
      %p104 = scmp.ne.s32.totalorder %s95, %s96
      %p105 = scmp.eq.s32.totalorder %s22, 0
      %p106 = por %p104, %p105
      %p107 = scmp.ne.s32.totalorder %s95, %s96
      %p108 = scmp.eq.s32.totalorder %s23, 1
      %p109 = por %p107, %p108
      %p111 = scmp.ne.s32.totalorder %s96, %s110
      %p112 = scmp.eq.s32.totalorder %s23, 0
      %p113 = por %p111, %p112
      %s114 = ssub.s32 %s17, %s24
      %p115 = scmp.eq.s32.totalorder %s114, 0
      %s117 = sadd.s32 %s116, 1
      %s118 = scalar_select %p115, %s116, %s117
      %p121 = pneg %p115
      %p122 = scmp.eq.s32.totalorder %s17, 1
      %p123 = por %p121, %p122
      %p124 = scmp.ne.s32.totalorder %s116, %s119
      %p125 = scmp.eq.s32.totalorder %s17, 0
      %p126 = por %p124, %p125
      %p127 = scmp.ne.s32.totalorder %s116, %s119
      %p128 = scmp.eq.s32.totalorder %s22, 1
      %p129 = por %p127, %p128
      %p130 = scmp.ne.s32.totalorder %s119, %s120
      %p131 = scmp.eq.s32.totalorder %s22, 0
      %p132 = por %p130, %p131
      %p133 = scmp.ne.s32.totalorder %s119, %s120
      %p134 = scmp.eq.s32.totalorder %s23, 1
      %p135 = por %p133, %p134
      %p137 = scmp.ne.s32.totalorder %s120, %s136
      %p138 = scmp.eq.s32.totalorder %s23, 0
      %p139 = por %p137, %p138
      %p140 = scmp.le.s32.totalorder 1, %s17
      %p141 = scmp.lt.s32.totalorder %s17, 3
      %p142 = pnand %p140, %p141
      %p143 = pneg %p142
      // Predicated region
      $region9: #{tpu_custom_call.1} parent=5 // pred_check
        _
      $region10: #{tpu_custom_call.1} parent=5 // pred_check_branch
        %145 = sbr.rel (%p142) target = $region12
      $region11: #{tpu_custom_call.1} parent=5 // pred_region
        %s146 = ssub.s32 %s17, 1
        // Predicated region
        $region13: #{tpu_custom_call.1} parent=11 // pred_check
          %p147 = pneg %p64
        $region14: #{tpu_custom_call.1} parent=11 // pred_check_branch
          %149 = sbr.rel (%p147) target = $region16
        $region15: #{tpu_custom_call.1} parent=11 // pred_region
          %s151 = ssub.s32 256, 256
          %152 = vsyncadd [#allocation6], %s151
          %s153 = sshll.u32 [#allocation5], 4
          %s154 = int_to_ptr.vmem [resolvable:$true] %s153
          %159 = dma.hbm_to_vmem [thread:$0]  %s1, 256, %s154, [#allocation6], 128, 128, 8
        $region16: #{tpu_custom_call.1} parent=11 // pred_fallthru
          _
        // Predicated region
        $region17: #{tpu_custom_call.1} parent=11 // pred_check
          %p160 = pneg %p85
        $region18: #{tpu_custom_call.1} parent=11 // pred_check_branch
          %162 = sbr.rel (%p160) target = $region20
        $region19: #{tpu_custom_call.1} parent=11 // pred_region
          _
        $region20: #{tpu_custom_call.1} parent=11 // pred_fallthru
          _
        // Predicated region
        $region21: #{tpu_custom_call.1} parent=11 // pred_check
          %p163 = pneg %p106
        $region22: #{tpu_custom_call.1} parent=11 // pred_check_branch
          %165 = sbr.rel (%p163) target = $region24
        $region23: #{tpu_custom_call.1} parent=11 // pred_region
          %s167 = ssub.s32 256, 256
          %168 = vsyncadd [#allocation6], %s167
          %s169 = sshll.u32 [#allocation7], 4
          %s170 = int_to_ptr.vmem [resolvable:$true] %s169
          %175 = dma.hbm_to_vmem [thread:$0]  %s3, 256, %s170, [#allocation6], 128, 128, 8
        $region24: #{tpu_custom_call.1} parent=11 // pred_fallthru
          _
      $region12: #{tpu_custom_call.1} parent=5 // pred_fallthru
        _
      %p176 = scmp.lt.s32.totalorder %s17, 2
      // Predicated region
      $region25: #{tpu_custom_call.1} parent=5 // pred_check
        %p177 = pneg %p176
      $region26: #{tpu_custom_call.1} parent=5 // pred_check_branch
        %179 = sbr.rel (%p177) target = $region28
      $region27: #{tpu_custom_call.1} parent=5 // pred_region
        // Predicated region
        $region29: #{tpu_custom_call.1} parent=27 // pred_check
          %p180 = pneg %p37
        $region30: #{tpu_custom_call.1} parent=27 // pred_check_branch
          %182 = sbr.rel (%p180) target = $region32
        $region31: #{tpu_custom_call.1} parent=27 // pred_region
          %s183 = sand.u32 %s27, 1
          %s184 = scalar_lea.sflag [#allocation3], %s183
          %s185 = sand.u32 %s27, 1
          %s186 = smul.addr %s185, 64
          %s187 = scalar_lea.vmem [#allocation2], %s186
          %s188 = smul.u32 4, %s17
          %s190 = ssub.s32 1024, 1024
          %191 = vsyncadd %s184, %s190
          %s192 = smul.addr %s188, 2
          %s193 = smul.addr %s192, 128
          %s194 = scalar_lea.hbm %s0, %s193
          %s195 = sshll.u32 %s187, 4
          %s196 = int_to_ptr.vmem [resolvable:$true] %s195
          %201 = dma.hbm_to_vmem [thread:$0]  %s194, 1024, %s196, %s184, 128, 128, 8
        $region32: #{tpu_custom_call.1} parent=27 // pred_fallthru
          _
      $region28: #{tpu_custom_call.1} parent=5 // pred_fallthru
        _
      %p202 = scmp.le.s32.totalorder 1, %s17
      %p203 = scmp.lt.s32.totalorder %s17, 3
      %p204 = pnand %p202, %p203
      %p205 = pneg %p204
      // Predicated region
      $region33: #{tpu_custom_call.1} parent=5 // pred_check
        _
      $region34: #{tpu_custom_call.1} parent=5 // pred_check_branch
        %207 = sbr.rel (%p204) target = $region36
      $region35: #{tpu_custom_call.1} parent=5 // pred_region
        %s208 = ssub.s32 %s17, 1
        %s209 = sand.u32 %s30, 1
        %s210 = scalar_lea.sflag [#allocation3], %s209
        %s211 = sand.u32 %s30, 1
        %s212 = smul.addr %s211, 64
        %s213 = scalar_lea.vmem [#allocation2], %s212
        // Predicated region
        $region37: #{tpu_custom_call.1} parent=35 // pred_check
          %p214 = pneg %p43
        $region38: #{tpu_custom_call.1} parent=35 // pred_check_branch
          %216 = sbr.rel (%p214) target = $region40
        $region39: #{tpu_custom_call.1} parent=35 // pred_region
          %217 = dma.done %s210, 1024
        $region40: #{tpu_custom_call.1} parent=35 // pred_fallthru
          _
        // Predicated region
        $region41: #{tpu_custom_call.1} parent=35 // pred_check
          %p218 = pneg %p64
        $region42: #{tpu_custom_call.1} parent=35 // pred_check_branch
          %220 = sbr.rel (%p218) target = $region44
        $region43: #{tpu_custom_call.1} parent=35 // pred_region
          %221 = dma.done [#allocation6], 256
        $region44: #{tpu_custom_call.1} parent=35 // pred_fallthru
          _
        // Predicated region
        $region45: #{tpu_custom_call.1} parent=35 // pred_check
          %p222 = pneg %p106
        $region46: #{tpu_custom_call.1} parent=35 // pred_check_branch
          %224 = sbr.rel (%p222) target = $region48
        $region47: #{tpu_custom_call.1} parent=35 // pred_region
          %225 = dma.done [#allocation6], 256
        $region48: #{tpu_custom_call.1} parent=35 // pred_fallthru
          _
        %s226 = sand.u32 %s30, 1
        %s227 = scalar_lea.sflag [#allocation3], %s226
        %s228 = sand.u32 %s30, 1
        %s229 = smul.addr %s228, 64
        %s230 = scalar_lea.vmem [#allocation2], %s229
        %p231 = pneg %p43
        %p232 = pneg %p40
        %p233 = pneg %p64
        %p234 = pneg %p61
        %p235 = pneg %p85
        %p236 = pneg %p82
        %p237 = pneg %p106
        %p238 = pneg %p103
        %p239 = pneg %p132
        %p240 = pneg %p129
        %s241 = sand.u32 %s119, 1
        %s242 = scalar_lea.sflag [#allocation4], %s241
        %s243 = sand.u32 %s119, 1
        %s244 = smul.addr %s243, 64
        %s245 = scalar_lea.vmem [#allocation8], %s244
        %s246 = smul.u32 4, %s22
        %s247 = smul.u32 4, %s22
        %v248 = vld [vmem:[%s213] sm:$0xff]
        %v249 = vld [vmem:[%s213 + $0x8] sm:$0xff]
        %v250 = vld [vmem:[%s213 + $0x10] sm:$0xff]
        %v251 = vld [vmem:[%s213 + $0x18] sm:$0xff]
        %v252 = vld [vmem:[%s213 + $0x20] sm:$0xff]
        %v253 = vld [vmem:[%s213 + $0x28] sm:$0xff]
        %v254 = vld [vmem:[%s213 + $0x30] sm:$0xff]
        %v255 = vld [vmem:[%s213 + $0x38] sm:$0xff]
        %v256 = vld [vmem:[#allocation5] sm:$0xff]
        %v257 = vld [vmem:[#allocation5 + $0x8] sm:$0xff]
        %v258 = vld [vmem:[%s2] sm:$0x1]
        %v260 = vlaneseq
        %v261 = vshrl.u32 %v260, 7
        %v262 = vsub.s32 0, %v261
        %v263 = vrot.slane %v258, %v262
        %vm265 = vcmask 130048
        %v267 = vsel %vm265, %v248, 0
        %v270 = vsel %vm265, %v249, 0
        %v273 = vsel %vm265, %v250, 0
        %v276 = vsel %vm265, %v251, 0
        %v279 = vsel %vm265, %v252, 0
        %v282 = vsel %vm265, %v253, 0
        %v285 = vsel %vm265, %v254, 0
        %v288 = vsel %vm265, %v255, 0
        %290 = vmatprep.subr.mxu0 0.0
        %291 = vmatpush1.msra.mxu0 0.0
        %292 = vmatprep.subr.mxu0 0.0
        %293 = vmatpush1.msra.mxu0 0.0
        %294 = vmatprep.subr.mxu0 0.0
        %295 = vmatpush1.msra.mxu0 0.0
        %296 = vmatprep.subr.mxu0 0.0
        %297 = vmatpush1.msra.mxu0 0.0
        %298 = vmatprep.subr.mxu0 0.0
        %299 = vmatpush1.msra.mxu0 0.0
        %300 = vmatprep.subr.mxu0 0.0
        %301 = vmatpush1.msra.mxu0 0.0
        %302 = vmatprep.subr.mxu0 0.0
        %303 = vmatpush1.msra.mxu0 0.0
        %304 = vmatprep.subr.mxu0 0.0
        %305 = vmatpush1.msra.mxu0 0.0
        %306 = vmatprep.subr.mxu0 0.0
        %307 = vmatpush1.msra.mxu0 0.0
        %308 = vmatprep.subr.mxu0 0.0
        %309 = vmatpush1.msra.mxu0 0.0
        %310 = vmatprep.subr.mxu0 0.0
        %311 = vmatpush1.msra.mxu0 0.0
        %312 = vmatprep.subr.mxu0 0.0
        %313 = vmatpush1.msra.mxu0 0.0
        %314 = vmatprep.subr.mxu0 0.0
        %315 = vmatpush1.msra.mxu0 0.0
        %316 = vmatprep.subr.mxu0 0.0
        %317 = vmatpush1.msra.mxu0 0.0
        %318 = vmatprep.subr.mxu0 0.0
        %319 = vmatpush1.msra.mxu0 %v257
        %320 = vmatprep.subr.mxu0 0.0
        %321 = vmatpush1.msra.mxu0 %v256
        %322 = vmatprep.subr.mxu0 0.0
        %323 = vmatpush2.msra.mxu0 0.0
        %324 = vmatprep.subr.mxu0 0.0
        %325 = vmatpush2.msra.mxu0 0.0
        %326 = vmatprep.subr.mxu0 0.0
        %327 = vmatpush2.msra.mxu0 0.0
        %328 = vmatprep.subr.mxu0 0.0
        %329 = vmatpush2.msra.mxu0 0.0
        %330 = vmatprep.subr.mxu0 0.0
        %331 = vmatpush2.msra.mxu0 0.0
        %332 = vmatprep.subr.mxu0 0.0
        %333 = vmatpush2.msra.mxu0 0.0
        %334 = vmatprep.subr.mxu0 0.0
        %335 = vmatpush2.msra.mxu0 0.0
        %336 = vmatprep.subr.mxu0 0.0
        %337 = vmatpush2.msra.mxu0 0.0
        %338 = vmatprep.subr.mxu0 0.0
        %339 = vmatpush2.msra.mxu0 0.0
        %340 = vmatprep.subr.mxu0 0.0
        %341 = vmatpush2.msra.mxu0 0.0
        %342 = vmatprep.subr.mxu0 0.0
        %343 = vmatpush2.msra.mxu0 0.0
        %344 = vmatprep.subr.mxu0 0.0
        %345 = vmatpush2.msra.mxu0 0.0
        %346 = vmatprep.subr.mxu0 0.0
        %347 = vmatpush2.msra.mxu0 0.0
        %348 = vmatprep.subr.mxu0 0.0
        %349 = vmatpush2.msra.mxu0 0.0
        %350 = vmatprep.subr.mxu0 0.0
        %351 = vmatpush2.msra.mxu0 0.0
        %352 = vmatprep.subr.mxu0 0.0
        %353 = vmatpush2.msra.mxu0 0.0
        %354 = vmatprep.mubr.f32.mxu0 0.0
        %355 = vmatmul.mubr.f32.gmra.mxu0 %v267
        %v356 = vpop.f32.mrf.mxu0
        %v357 = vadd.f32 %v263, %v356
        %v358 = vpop.f32.mrf.mxu0
        %359 = vmatprep.mubr.f32.mxu0 0.0
        %360 = vmatmul.mubr.f32.gmra.mxu0 %v270
        %v361 = vpop.f32.mrf.mxu0
        %v362 = vadd.f32 %v263, %v361
        %v363 = vpop.f32.mrf.mxu0
        %364 = vmatprep.mubr.f32.mxu0 0.0
        %365 = vmatmul.mubr.f32.gmra.mxu0 %v273
        %v366 = vpop.f32.mrf.mxu0
        %v367 = vadd.f32 %v263, %v366
        %v368 = vpop.f32.mrf.mxu0
        %369 = vmatprep.mubr.f32.mxu0 0.0
        %370 = vmatmul.mubr.f32.gmra.mxu0 %v276
        %v371 = vpop.f32.mrf.mxu0
        %v372 = vadd.f32 %v263, %v371
        %v373 = vpop.f32.mrf.mxu0
        %374 = vmatprep.mubr.f32.mxu0 0.0
        %375 = vmatmul.mubr.f32.gmra.mxu0 %v279
        %v376 = vpop.f32.mrf.mxu0
        %v377 = vadd.f32 %v263, %v376
        %v378 = vpop.f32.mrf.mxu0
        %379 = vmatprep.mubr.f32.mxu0 0.0
        %380 = vmatmul.mubr.f32.gmra.mxu0 %v282
        %v381 = vpop.f32.mrf.mxu0
        %v382 = vadd.f32 %v263, %v381
        %v383 = vpop.f32.mrf.mxu0
        %384 = vmatprep.mubr.f32.mxu0 0.0
        %385 = vmatmul.mubr.f32.gmra.mxu0 %v285
        %v386 = vpop.f32.mrf.mxu0
        %v387 = vadd.f32 %v263, %v386
        %v388 = vpop.f32.mrf.mxu0
        %389 = vmatprep.mubr.f32.mxu0 0.0
        %390 = vmatmul.mubr.f32.gmra.mxu0 %v288
        %v391 = vpop.f32.mrf.mxu0
        %v392 = vadd.f32 %v263, %v391
        %v393 = vpop.f32.mrf.mxu0
        %394 = vdwg.mxu0
        %397 = vrot.lane.b32.xlu0 %v357, 96
        %v398 = vpop.permute.xlu0 %397
        %399 = vrot.lane.b32.xlu0 %v362, 96
        %v400 = vpop.permute.xlu0 %399
        %vm401 = vcmask 261120
        %v402 = vsel %vm401, %v357, 0
        %v404 = vsel %vm401, %v362, 0
        %v406 = vsel %vm401, %v398, 0
        %v408 = vsel %vm401, %v400, 0
        %410 = vmatprep.subr.mxu0 0.0
        %411 = vmatpush1.xpose.msra.mxu0 0.0
        %412 = vmatprep.subr.mxu0 0.0
        %413 = vmatpush1.xpose.msra.mxu0 0.0
        %414 = vmatprep.subr.mxu0 0.0
        %415 = vmatpush1.xpose.msra.mxu0 0.0
        %416 = vmatprep.subr.mxu0 0.0
        %417 = vmatpush1.xpose.msra.mxu0 0.0
        %418 = vmatprep.subr.mxu0 0.0
        %419 = vmatpush1.xpose.msra.mxu0 0.0
        %420 = vmatprep.subr.mxu0 0.0
        %421 = vmatpush1.xpose.msra.mxu0 0.0
        %422 = vmatprep.subr.mxu0 0.0
        %423 = vmatpush1.xpose.msra.mxu0 0.0
        %424 = vmatprep.subr.mxu0 0.0
        %425 = vmatpush1.xpose.msra.mxu0 0.0
        %426 = vmatprep.subr.mxu0 0.0
        %427 = vmatpush1.xpose.msra.mxu0 0.0
        %428 = vmatprep.subr.mxu0 0.0
        %429 = vmatpush1.xpose.msra.mxu0 0.0
        %430 = vmatprep.subr.mxu0 0.0
        %431 = vmatpush1.xpose.msra.mxu0 0.0
        %432 = vmatprep.subr.mxu0 0.0
        %433 = vmatpush1.xpose.msra.mxu0 0.0
        %434 = vmatprep.subr.mxu0 0.0
        %435 = vmatpush1.xpose.msra.mxu0 0.0
        %436 = vmatprep.subr.mxu0 0.0
        %437 = vmatpush1.xpose.msra.mxu0 0.0
        %438 = vmatprep.subr.mxu0 0.0
        %439 = vmatpush1.xpose.msra.mxu0 %v408
        %440 = vmatprep.subr.mxu0 0.0
        %441 = vmatpush1.xpose.msra.mxu0 %v406
        %442 = vmatprep.subr.mxu0 0.0
        %443 = vmatpush2.xpose.msra.mxu0 0.0
        %444 = vmatprep.subr.mxu0 0.0
        %445 = vmatpush2.xpose.msra.mxu0 0.0
        %446 = vmatprep.subr.mxu0 0.0
        %447 = vmatpush2.xpose.msra.mxu0 0.0
        %448 = vmatprep.subr.mxu0 0.0
        %449 = vmatpush2.xpose.msra.mxu0 0.0
        %450 = vmatprep.subr.mxu0 0.0
        %451 = vmatpush2.xpose.msra.mxu0 0.0
        %452 = vmatprep.subr.mxu0 0.0
        %453 = vmatpush2.xpose.msra.mxu0 0.0
        %454 = vmatprep.subr.mxu0 0.0
        %455 = vmatpush2.xpose.msra.mxu0 0.0
        %456 = vmatprep.subr.mxu0 0.0
        %457 = vmatpush2.xpose.msra.mxu0 0.0
        %458 = vmatprep.subr.mxu0 0.0
        %459 = vmatpush2.xpose.msra.mxu0 0.0
        %460 = vmatprep.subr.mxu0 0.0
        %461 = vmatpush2.xpose.msra.mxu0 0.0
        %462 = vmatprep.subr.mxu0 0.0
        %463 = vmatpush2.xpose.msra.mxu0 0.0
        %464 = vmatprep.subr.mxu0 0.0
        %465 = vmatpush2.xpose.msra.mxu0 0.0
        %466 = vmatprep.subr.mxu0 0.0
        %467 = vmatpush2.xpose.msra.mxu0 0.0
        %468 = vmatprep.subr.mxu0 0.0
        %469 = vmatpush2.xpose.msra.mxu0 0.0
        %470 = vmatprep.subr.mxu0 0.0
        %471 = vmatpush2.xpose.msra.mxu0 0.0
        %472 = vmatprep.subr.mxu0 0.0
        %473 = vmatpush2.xpose.msra.mxu0 0.0
        %474 = vmatprep.mubr.f32.mxu0 0.0
        %475 = vmatmul.mubr.f32.gmra.mxu0 %v402
        %v476 = vpop.f32.mrf.mxu0
        %v477 = vadd.f32 0.0, %v476
        %v478 = vpop.f32.mrf.mxu0
        %479 = vmatprep.mubr.f32.mxu0 0.0
        %480 = vmatmul.mubr.f32.gmra.mxu0 %v404
        %v481 = vpop.f32.mrf.mxu0
        %v482 = vadd.f32 0.0, %v481
        %v483 = vpop.f32.mrf.mxu0
        %484 = vdwg.mxu0
        %487 = vrot.lane.b32.xlu0 %v367, 96
        %v488 = vpop.permute.xlu0 %487
        %489 = vrot.lane.b32.xlu0 %v372, 96
        %v490 = vpop.permute.xlu0 %489
        %v491 = vsel %vm401, %v367, 0
        %v493 = vsel %vm401, %v372, 0
        %v495 = vsel %vm401, %v488, 0
        %v497 = vsel %vm401, %v490, 0
        %499 = vmatprep.subr.mxu0 0.0
        %500 = vmatpush1.xpose.msra.mxu0 0.0
        %501 = vmatprep.subr.mxu0 0.0
        %502 = vmatpush1.xpose.msra.mxu0 0.0
        %503 = vmatprep.subr.mxu0 0.0
        %504 = vmatpush1.xpose.msra.mxu0 0.0
        %505 = vmatprep.subr.mxu0 0.0
        %506 = vmatpush1.xpose.msra.mxu0 0.0
        %507 = vmatprep.subr.mxu0 0.0
        %508 = vmatpush1.xpose.msra.mxu0 0.0
        %509 = vmatprep.subr.mxu0 0.0
        %510 = vmatpush1.xpose.msra.mxu0 0.0
        %511 = vmatprep.subr.mxu0 0.0
        %512 = vmatpush1.xpose.msra.mxu0 0.0
        %513 = vmatprep.subr.mxu0 0.0
        %514 = vmatpush1.xpose.msra.mxu0 0.0
        %515 = vmatprep.subr.mxu0 0.0
        %516 = vmatpush1.xpose.msra.mxu0 0.0
        %517 = vmatprep.subr.mxu0 0.0
        %518 = vmatpush1.xpose.msra.mxu0 0.0
        %519 = vmatprep.subr.mxu0 0.0
        %520 = vmatpush1.xpose.msra.mxu0 0.0
        %521 = vmatprep.subr.mxu0 0.0
        %522 = vmatpush1.xpose.msra.mxu0 0.0
        %523 = vmatprep.subr.mxu0 0.0
        %524 = vmatpush1.xpose.msra.mxu0 0.0
        %525 = vmatprep.subr.mxu0 0.0
        %526 = vmatpush1.xpose.msra.mxu0 0.0
        %527 = vmatprep.subr.mxu0 0.0
        %528 = vmatpush1.xpose.msra.mxu0 %v497
        %529 = vmatprep.subr.mxu0 0.0
        %530 = vmatpush1.xpose.msra.mxu0 %v495
        %531 = vmatprep.subr.mxu0 0.0
        %532 = vmatpush2.xpose.msra.mxu0 0.0
        %533 = vmatprep.subr.mxu0 0.0
        %534 = vmatpush2.xpose.msra.mxu0 0.0
        %535 = vmatprep.subr.mxu0 0.0
        %536 = vmatpush2.xpose.msra.mxu0 0.0
        %537 = vmatprep.subr.mxu0 0.0
        %538 = vmatpush2.xpose.msra.mxu0 0.0
        %539 = vmatprep.subr.mxu0 0.0
        %540 = vmatpush2.xpose.msra.mxu0 0.0
        %541 = vmatprep.subr.mxu0 0.0
        %542 = vmatpush2.xpose.msra.mxu0 0.0
        %543 = vmatprep.subr.mxu0 0.0
        %544 = vmatpush2.xpose.msra.mxu0 0.0
        %545 = vmatprep.subr.mxu0 0.0
        %546 = vmatpush2.xpose.msra.mxu0 0.0
        %547 = vmatprep.subr.mxu0 0.0
        %548 = vmatpush2.xpose.msra.mxu0 0.0
        %549 = vmatprep.subr.mxu0 0.0
        %550 = vmatpush2.xpose.msra.mxu0 0.0
        %551 = vmatprep.subr.mxu0 0.0
        %552 = vmatpush2.xpose.msra.mxu0 0.0
        %553 = vmatprep.subr.mxu0 0.0
        %554 = vmatpush2.xpose.msra.mxu0 0.0
        %555 = vmatprep.subr.mxu0 0.0
        %556 = vmatpush2.xpose.msra.mxu0 0.0
        %557 = vmatprep.subr.mxu0 0.0
        %558 = vmatpush2.xpose.msra.mxu0 0.0
        %559 = vmatprep.subr.mxu0 0.0
        %560 = vmatpush2.xpose.msra.mxu0 0.0
        %561 = vmatprep.subr.mxu0 0.0
        %562 = vmatpush2.xpose.msra.mxu0 0.0
        %563 = vmatprep.mubr.f32.mxu0 0.0
        %564 = vmatmul.mubr.f32.gmra.mxu0 %v491
        %v565 = vpop.f32.mrf.mxu0
        %v566 = vadd.f32 0.0, %v565
        %v567 = vpop.f32.mrf.mxu0
        %568 = vmatprep.mubr.f32.mxu0 0.0
        %569 = vmatmul.mubr.f32.gmra.mxu0 %v493
        %v570 = vpop.f32.mrf.mxu0
        %v571 = vadd.f32 0.0, %v570
        %v572 = vpop.f32.mrf.mxu0
        %573 = vdwg.mxu0
        %576 = vrot.lane.b32.xlu0 %v377, 96
        %v577 = vpop.permute.xlu0 %576
        %578 = vrot.lane.b32.xlu0 %v382, 96
        %v579 = vpop.permute.xlu0 %578
        %v580 = vsel %vm401, %v377, 0
        %v582 = vsel %vm401, %v382, 0
        %v584 = vsel %vm401, %v577, 0
        %v586 = vsel %vm401, %v579, 0
        %588 = vmatprep.subr.mxu0 0.0
        %589 = vmatpush1.xpose.msra.mxu0 0.0
        %590 = vmatprep.subr.mxu0 0.0
        %591 = vmatpush1.xpose.msra.mxu0 0.0
        %592 = vmatprep.subr.mxu0 0.0
        %593 = vmatpush1.xpose.msra.mxu0 0.0
        %594 = vmatprep.subr.mxu0 0.0
        %595 = vmatpush1.xpose.msra.mxu0 0.0
        %596 = vmatprep.subr.mxu0 0.0
        %597 = vmatpush1.xpose.msra.mxu0 0.0
        %598 = vmatprep.subr.mxu0 0.0
        %599 = vmatpush1.xpose.msra.mxu0 0.0
        %600 = vmatprep.subr.mxu0 0.0
        %601 = vmatpush1.xpose.msra.mxu0 0.0
        %602 = vmatprep.subr.mxu0 0.0
        %603 = vmatpush1.xpose.msra.mxu0 0.0
        %604 = vmatprep.subr.mxu0 0.0
        %605 = vmatpush1.xpose.msra.mxu0 0.0
        %606 = vmatprep.subr.mxu0 0.0
        %607 = vmatpush1.xpose.msra.mxu0 0.0
        %608 = vmatprep.subr.mxu0 0.0
        %609 = vmatpush1.xpose.msra.mxu0 0.0
        %610 = vmatprep.subr.mxu0 0.0
        %611 = vmatpush1.xpose.msra.mxu0 0.0
        %612 = vmatprep.subr.mxu0 0.0
        %613 = vmatpush1.xpose.msra.mxu0 0.0
        %614 = vmatprep.subr.mxu0 0.0
        %615 = vmatpush1.xpose.msra.mxu0 0.0
        %616 = vmatprep.subr.mxu0 0.0
        %617 = vmatpush1.xpose.msra.mxu0 %v586
        %618 = vmatprep.subr.mxu0 0.0
        %619 = vmatpush1.xpose.msra.mxu0 %v584
        %620 = vmatprep.subr.mxu0 0.0
        %621 = vmatpush2.xpose.msra.mxu0 0.0
        %622 = vmatprep.subr.mxu0 0.0
        %623 = vmatpush2.xpose.msra.mxu0 0.0
        %624 = vmatprep.subr.mxu0 0.0
        %625 = vmatpush2.xpose.msra.mxu0 0.0
        %626 = vmatprep.subr.mxu0 0.0
        %627 = vmatpush2.xpose.msra.mxu0 0.0
        %628 = vmatprep.subr.mxu0 0.0
        %629 = vmatpush2.xpose.msra.mxu0 0.0
        %630 = vmatprep.subr.mxu0 0.0
        %631 = vmatpush2.xpose.msra.mxu0 0.0
        %632 = vmatprep.subr.mxu0 0.0
        %633 = vmatpush2.xpose.msra.mxu0 0.0
        %634 = vmatprep.subr.mxu0 0.0
        %635 = vmatpush2.xpose.msra.mxu0 0.0
        %636 = vmatprep.subr.mxu0 0.0
        %637 = vmatpush2.xpose.msra.mxu0 0.0
        %638 = vmatprep.subr.mxu0 0.0
        %639 = vmatpush2.xpose.msra.mxu0 0.0
        %640 = vmatprep.subr.mxu0 0.0
        %641 = vmatpush2.xpose.msra.mxu0 0.0
        %642 = vmatprep.subr.mxu0 0.0
        %643 = vmatpush2.xpose.msra.mxu0 0.0
        %644 = vmatprep.subr.mxu0 0.0
        %645 = vmatpush2.xpose.msra.mxu0 0.0
        %646 = vmatprep.subr.mxu0 0.0
        %647 = vmatpush2.xpose.msra.mxu0 0.0
        %648 = vmatprep.subr.mxu0 0.0
        %649 = vmatpush2.xpose.msra.mxu0 0.0
        %650 = vmatprep.subr.mxu0 0.0
        %651 = vmatpush2.xpose.msra.mxu0 0.0
        %652 = vmatprep.mubr.f32.mxu0 0.0
        %653 = vmatmul.mubr.f32.gmra.mxu0 %v580
        %v654 = vpop.f32.mrf.mxu0
        %v655 = vadd.f32 0.0, %v654
        %v656 = vpop.f32.mrf.mxu0
        %657 = vmatprep.mubr.f32.mxu0 0.0
        %658 = vmatmul.mubr.f32.gmra.mxu0 %v582
        %v659 = vpop.f32.mrf.mxu0
        %v660 = vadd.f32 0.0, %v659
        %v661 = vpop.f32.mrf.mxu0
        %662 = vdwg.mxu0
        %665 = vrot.lane.b32.xlu0 %v387, 96
        %v666 = vpop.permute.xlu0 %665
        %667 = vrot.lane.b32.xlu0 %v392, 96
        %v668 = vpop.permute.xlu0 %667
        %v669 = vsel %vm401, %v387, 0
        %v671 = vsel %vm401, %v392, 0
        %v673 = vsel %vm401, %v666, 0
        %v675 = vsel %vm401, %v668, 0
        %677 = vmatprep.subr.mxu0 0.0
        %678 = vmatpush1.xpose.msra.mxu0 0.0
        %679 = vmatprep.subr.mxu0 0.0
        %680 = vmatpush1.xpose.msra.mxu0 0.0
        %681 = vmatprep.subr.mxu0 0.0
        %682 = vmatpush1.xpose.msra.mxu0 0.0
        %683 = vmatprep.subr.mxu0 0.0
        %684 = vmatpush1.xpose.msra.mxu0 0.0
        %685 = vmatprep.subr.mxu0 0.0
        %686 = vmatpush1.xpose.msra.mxu0 0.0
        %687 = vmatprep.subr.mxu0 0.0
        %688 = vmatpush1.xpose.msra.mxu0 0.0
        %689 = vmatprep.subr.mxu0 0.0
        %690 = vmatpush1.xpose.msra.mxu0 0.0
        %691 = vmatprep.subr.mxu0 0.0
        %692 = vmatpush1.xpose.msra.mxu0 0.0
        %693 = vmatprep.subr.mxu0 0.0
        %694 = vmatpush1.xpose.msra.mxu0 0.0
        %695 = vmatprep.subr.mxu0 0.0
        %696 = vmatpush1.xpose.msra.mxu0 0.0
        %697 = vmatprep.subr.mxu0 0.0
        %698 = vmatpush1.xpose.msra.mxu0 0.0
        %699 = vmatprep.subr.mxu0 0.0
        %700 = vmatpush1.xpose.msra.mxu0 0.0
        %701 = vmatprep.subr.mxu0 0.0
        %702 = vmatpush1.xpose.msra.mxu0 0.0
        %703 = vmatprep.subr.mxu0 0.0
        %704 = vmatpush1.xpose.msra.mxu0 0.0
        %705 = vmatprep.subr.mxu0 0.0
        %706 = vmatpush1.xpose.msra.mxu0 %v675
        %707 = vmatprep.subr.mxu0 0.0
        %708 = vmatpush1.xpose.msra.mxu0 %v673
        %709 = vmatprep.subr.mxu0 0.0
        %710 = vmatpush2.xpose.msra.mxu0 0.0
        %711 = vmatprep.subr.mxu0 0.0
        %712 = vmatpush2.xpose.msra.mxu0 0.0
        %713 = vmatprep.subr.mxu0 0.0
        %714 = vmatpush2.xpose.msra.mxu0 0.0
        %715 = vmatprep.subr.mxu0 0.0
        %716 = vmatpush2.xpose.msra.mxu0 0.0
        %717 = vmatprep.subr.mxu0 0.0
        %718 = vmatpush2.xpose.msra.mxu0 0.0
        %719 = vmatprep.subr.mxu0 0.0
        %720 = vmatpush2.xpose.msra.mxu0 0.0
        %721 = vmatprep.subr.mxu0 0.0
        %722 = vmatpush2.xpose.msra.mxu0 0.0
        %723 = vmatprep.subr.mxu0 0.0
        %724 = vmatpush2.xpose.msra.mxu0 0.0
        %725 = vmatprep.subr.mxu0 0.0
        %726 = vmatpush2.xpose.msra.mxu0 0.0
        %727 = vmatprep.subr.mxu0 0.0
        %728 = vmatpush2.xpose.msra.mxu0 0.0
        %729 = vmatprep.subr.mxu0 0.0
        %730 = vmatpush2.xpose.msra.mxu0 0.0
        %731 = vmatprep.subr.mxu0 0.0
        %732 = vmatpush2.xpose.msra.mxu0 0.0
        %733 = vmatprep.subr.mxu0 0.0
        %734 = vmatpush2.xpose.msra.mxu0 0.0
        %735 = vmatprep.subr.mxu0 0.0
        %736 = vmatpush2.xpose.msra.mxu0 0.0
        %737 = vmatprep.subr.mxu0 0.0
        %738 = vmatpush2.xpose.msra.mxu0 0.0
        %739 = vmatprep.subr.mxu0 0.0
        %740 = vmatpush2.xpose.msra.mxu0 0.0
        %741 = vmatprep.mubr.f32.mxu0 0.0
        %742 = vmatmul.mubr.f32.gmra.mxu0 %v669
        %v743 = vpop.f32.mrf.mxu0
        %v744 = vadd.f32 0.0, %v743
        %v745 = vpop.f32.mrf.mxu0
        %746 = vmatprep.mubr.f32.mxu0 0.0
        %747 = vmatmul.mubr.f32.gmra.mxu0 %v671
        %v748 = vpop.f32.mrf.mxu0
        %v749 = vadd.f32 0.0, %v748
        %v750 = vpop.f32.mrf.mxu0
        %751 = vdwg.mxu0
        %v752 = vsel %vm265, %v477, -inf
        %v753 = vsel %vm265, %v482, -inf
        %v754 = vmax.f32 %v752, %v753
        %v755 = vrot.slane %v754, 4
        %v756 = vmax.f32 %v754, %v755
        %v757 = vrot.slane %v756, 2
        %v758 = vmax.f32 %v756, %v757
        %v759 = vrot.slane %v758, 1
        %v760 = vmax.f32 %v758, %v759
        %v761 = vsel %vm265, %v566, -inf
        %v762 = vsel %vm265, %v571, -inf
        %v763 = vmax.f32 %v761, %v762
        %v764 = vrot.slane %v763, 4
        %v765 = vmax.f32 %v763, %v764
        %v766 = vrot.slane %v765, 2
        %v767 = vmax.f32 %v765, %v766
        %v768 = vrot.slane %v767, 1
        %v769 = vmax.f32 %v767, %v768
        %v770 = vsel %vm265, %v655, -inf
        %v771 = vsel %vm265, %v660, -inf
        %v772 = vmax.f32 %v770, %v771
        %v773 = vrot.slane %v772, 4
        %v774 = vmax.f32 %v772, %v773
        %v775 = vrot.slane %v774, 2
        %v776 = vmax.f32 %v774, %v775
        %v777 = vrot.slane %v776, 1
        %v778 = vmax.f32 %v776, %v777
        %v779 = vsel %vm265, %v744, -inf
        %v780 = vsel %vm265, %v749, -inf
        %v781 = vmax.f32 %v779, %v780
        %v782 = vrot.slane %v781, 4
        %v783 = vmax.f32 %v781, %v782
        %v784 = vrot.slane %v783, 2
        %v785 = vmax.f32 %v783, %v784
        %v786 = vrot.slane %v785, 1
        %v787 = vmax.f32 %v785, %v786
        %v788 = vsub.f32 %v477, %v760
        %v789 = vsub.f32 %v482, %v760
        %v790 = vsub.f32 %v566, %v769
        %v791 = vsub.f32 %v571, %v769
        %v792 = vsub.f32 %v655, %v778
        %v793 = vsub.f32 %v660, %v778
        %v794 = vsub.f32 %v744, %v787
        %v795 = vsub.f32 %v749, %v787
        %v796 = vmul.f32 %v788, 1.442695
        %v797 = vpow.pop %v796
        %v798 = vmul.f32 %v789, 1.442695
        %v799 = vpow.pop %v798
        %v800 = vmul.f32 %v790, 1.442695
        %v801 = vpow.pop %v800
        %v802 = vmul.f32 %v791, 1.442695
        %v803 = vpow.pop %v802
        %v804 = vmul.f32 %v792, 1.442695
        %v805 = vpow.pop %v804
        %v806 = vmul.f32 %v793, 1.442695
        %v807 = vpow.pop %v806
        %v808 = vmul.f32 %v794, 1.442695
        %v809 = vpow.pop %v808
        %v810 = vmul.f32 %v795, 1.442695
        %v811 = vpow.pop %v810
        %v812 = vsel %vm265, %v797, 0.0
        %v813 = vsel %vm265, %v799, 0.0
        %v814 = vadd.f32 %v812, %v813
        %v815 = vrot.slane %v814, 4
        %v816 = vadd.f32 %v814, %v815
        %v817 = vrot.slane %v816, 2
        %v818 = vadd.f32 %v816, %v817
        %v819 = vrot.slane %v818, 1
        %v820 = vadd.f32 %v818, %v819
        %v821 = vsel %vm265, %v801, 0.0
        %v822 = vsel %vm265, %v803, 0.0
        %v823 = vadd.f32 %v821, %v822
        %v824 = vrot.slane %v823, 4
        %v825 = vadd.f32 %v823, %v824
        %v826 = vrot.slane %v825, 2
        %v827 = vadd.f32 %v825, %v826
        %v828 = vrot.slane %v827, 1
        %v829 = vadd.f32 %v827, %v828
        %v830 = vsel %vm265, %v805, 0.0
        %v831 = vsel %vm265, %v807, 0.0
        %v832 = vadd.f32 %v830, %v831
        %v833 = vrot.slane %v832, 4
        %v834 = vadd.f32 %v832, %v833
        %v835 = vrot.slane %v834, 2
        %v836 = vadd.f32 %v834, %v835
        %v837 = vrot.slane %v836, 1
        %v838 = vadd.f32 %v836, %v837
        %v839 = vsel %vm265, %v809, 0.0
        %v840 = vsel %vm265, %v811, 0.0
        %v841 = vadd.f32 %v839, %v840
        %v842 = vrot.slane %v841, 4
        %v843 = vadd.f32 %v841, %v842
        %v844 = vrot.slane %v843, 2
        %v845 = vadd.f32 %v843, %v844
        %v846 = vrot.slane %v845, 1
        %v847 = vadd.f32 %v845, %v846
        %v848 = vrcp.pop %v820
        %v849 = vrcp.pop %v829
        %v850 = vrcp.pop %v838
        %v851 = vrcp.pop %v847
        %v852 = vmul.f32 %v797, %v848
        %v853 = vmul.f32 %v799, %v848
        %v854 = vmul.f32 %v801, %v849
        %v855 = vmul.f32 %v803, %v849
        %v856 = vmul.f32 %v805, %v850
        %v857 = vmul.f32 %v807, %v850
        %v858 = vmul.f32 %v809, %v851
        %v859 = vmul.f32 %v811, %v851
        %v860 = vld [vmem:[#allocation7] sm:$0xff]
        %v861 = vld [vmem:[#allocation7 + $0x8] sm:$0xff]
        %v863 = vsel %vm265, %v852, 0
        %v866 = vsel %vm265, %v853, 0
        %v869 = vsel %vm265, %v854, 0
        %v872 = vsel %vm265, %v855, 0
        %v875 = vsel %vm265, %v856, 0
        %v878 = vsel %vm265, %v857, 0
        %v881 = vsel %vm265, %v858, 0
        %v884 = vsel %vm265, %v859, 0
        %886 = vmatprep.subr.mxu0 0.0
        %887 = vmatpush1.msra.mxu0 0.0
        %888 = vmatprep.subr.mxu0 0.0
        %889 = vmatpush1.msra.mxu0 0.0
        %890 = vmatprep.subr.mxu0 0.0
        %891 = vmatpush1.msra.mxu0 0.0
        %892 = vmatprep.subr.mxu0 0.0
        %893 = vmatpush1.msra.mxu0 0.0
        %894 = vmatprep.subr.mxu0 0.0
        %895 = vmatpush1.msra.mxu0 0.0
        %896 = vmatprep.subr.mxu0 0.0
        %897 = vmatpush1.msra.mxu0 0.0
        %898 = vmatprep.subr.mxu0 0.0
        %899 = vmatpush1.msra.mxu0 0.0
        %900 = vmatprep.subr.mxu0 0.0
        %901 = vmatpush1.msra.mxu0 0.0
        %902 = vmatprep.subr.mxu0 0.0
        %903 = vmatpush1.msra.mxu0 0.0
        %904 = vmatprep.subr.mxu0 0.0
        %905 = vmatpush1.msra.mxu0 0.0
        %906 = vmatprep.subr.mxu0 0.0
        %907 = vmatpush1.msra.mxu0 0.0
        %908 = vmatprep.subr.mxu0 0.0
        %909 = vmatpush1.msra.mxu0 0.0
        %910 = vmatprep.subr.mxu0 0.0
        %911 = vmatpush1.msra.mxu0 0.0
        %912 = vmatprep.subr.mxu0 0.0
        %913 = vmatpush1.msra.mxu0 0.0
        %914 = vmatprep.subr.mxu0 0.0
        %915 = vmatpush1.msra.mxu0 %v861
        %916 = vmatprep.subr.mxu0 0.0
        %917 = vmatpush1.msra.mxu0 %v860
        %918 = vmatprep.subr.mxu0 0.0
        %919 = vmatpush2.msra.mxu0 0.0
        %920 = vmatprep.subr.mxu0 0.0
        %921 = vmatpush2.msra.mxu0 0.0
        %922 = vmatprep.subr.mxu0 0.0
        %923 = vmatpush2.msra.mxu0 0.0
        %924 = vmatprep.subr.mxu0 0.0
        %925 = vmatpush2.msra.mxu0 0.0
        %926 = vmatprep.subr.mxu0 0.0
        %927 = vmatpush2.msra.mxu0 0.0
        %928 = vmatprep.subr.mxu0 0.0
        %929 = vmatpush2.msra.mxu0 0.0
        %930 = vmatprep.subr.mxu0 0.0
        %931 = vmatpush2.msra.mxu0 0.0
        %932 = vmatprep.subr.mxu0 0.0
        %933 = vmatpush2.msra.mxu0 0.0
        %934 = vmatprep.subr.mxu0 0.0
        %935 = vmatpush2.msra.mxu0 0.0
        %936 = vmatprep.subr.mxu0 0.0
        %937 = vmatpush2.msra.mxu0 0.0
        %938 = vmatprep.subr.mxu0 0.0
        %939 = vmatpush2.msra.mxu0 0.0
        %940 = vmatprep.subr.mxu0 0.0
        %941 = vmatpush2.msra.mxu0 0.0
        %942 = vmatprep.subr.mxu0 0.0
        %943 = vmatpush2.msra.mxu0 0.0
        %944 = vmatprep.subr.mxu0 0.0
        %945 = vmatpush2.msra.mxu0 0.0
        %946 = vmatprep.subr.mxu0 0.0
        %947 = vmatpush2.msra.mxu0 0.0
        %948 = vmatprep.subr.mxu0 0.0
        %949 = vmatpush2.msra.mxu0 0.0
        %950 = vmatprep.mubr.f32.mxu0 0.0
        %951 = vmatmul.mubr.f32.gmra.mxu0 %v863
        %v952 = vpop.f32.mrf.mxu0
        %v953 = vadd.f32 0.0, %v952
        %v954 = vpop.f32.mrf.mxu0
        %955 = vmatprep.mubr.f32.mxu0 0.0
        %956 = vmatmul.mubr.f32.gmra.mxu0 %v866
        %v957 = vpop.f32.mrf.mxu0
        %v958 = vadd.f32 0.0, %v957
        %v959 = vpop.f32.mrf.mxu0
        %960 = vmatprep.mubr.f32.mxu0 0.0
        %961 = vmatmul.mubr.f32.gmra.mxu0 %v869
        %v962 = vpop.f32.mrf.mxu0
        %v963 = vadd.f32 0.0, %v962
        %v964 = vpop.f32.mrf.mxu0
        %965 = vmatprep.mubr.f32.mxu0 0.0
        %966 = vmatmul.mubr.f32.gmra.mxu0 %v872
        %v967 = vpop.f32.mrf.mxu0
        %v968 = vadd.f32 0.0, %v967
        %v969 = vpop.f32.mrf.mxu0
        %970 = vmatprep.mubr.f32.mxu0 0.0
        %971 = vmatmul.mubr.f32.gmra.mxu0 %v875
        %v972 = vpop.f32.mrf.mxu0
        %v973 = vadd.f32 0.0, %v972
        %v974 = vpop.f32.mrf.mxu0
        %975 = vmatprep.mubr.f32.mxu0 0.0
        %976 = vmatmul.mubr.f32.gmra.mxu0 %v878
        %v977 = vpop.f32.mrf.mxu0
        %v978 = vadd.f32 0.0, %v977
        %v979 = vpop.f32.mrf.mxu0
        %980 = vmatprep.mubr.f32.mxu0 0.0
        %981 = vmatmul.mubr.f32.gmra.mxu0 %v881
        %v982 = vpop.f32.mrf.mxu0
        %v983 = vadd.f32 0.0, %v982
        %v984 = vpop.f32.mrf.mxu0
        %985 = vmatprep.mubr.f32.mxu0 0.0
        %986 = vmatmul.mubr.f32.gmra.mxu0 %v884
        %v987 = vpop.f32.mrf.mxu0
        %v988 = vadd.f32 0.0, %v987
        %v989 = vpop.f32.mrf.mxu0
        %990 = vdwg.mxu0
        %991 = vrot.lane.b32.xlu0 %v357, 64
        %v992 = vpop.permute.xlu0 %991
        %993 = vrot.lane.b32.xlu0 %v362, 64
        %v994 = vpop.permute.xlu0 %993
        %v998 = vsel %vm265, %v953, 0
        %v1001 = vsel %vm265, %v958, 0
        %1003 = vmatprep.subr.mxu0 0.0
        %1004 = vmatpush1.msra.mxu0 0.0
        %1005 = vmatprep.subr.mxu0 0.0
        %1006 = vmatpush1.msra.mxu0 0.0
        %1007 = vmatprep.subr.mxu0 0.0
        %1008 = vmatpush1.msra.mxu0 0.0
        %1009 = vmatprep.subr.mxu0 0.0
        %1010 = vmatpush1.msra.mxu0 0.0
        %1011 = vmatprep.subr.mxu0 0.0
        %1012 = vmatpush1.msra.mxu0 0.0
        %1013 = vmatprep.subr.mxu0 0.0
        %1014 = vmatpush1.msra.mxu0 0.0
        %1015 = vmatprep.subr.mxu0 0.0
        %1016 = vmatpush1.msra.mxu0 0.0
        %1017 = vmatprep.subr.mxu0 0.0
        %1018 = vmatpush1.msra.mxu0 0.0
        %1019 = vmatprep.subr.mxu0 0.0
        %1020 = vmatpush1.msra.mxu0 0.0
        %1021 = vmatprep.subr.mxu0 0.0
        %1022 = vmatpush1.msra.mxu0 0.0
        %1023 = vmatprep.subr.mxu0 0.0
        %1024 = vmatpush1.msra.mxu0 0.0
        %1025 = vmatprep.subr.mxu0 0.0
        %1026 = vmatpush1.msra.mxu0 0.0
        %1027 = vmatprep.subr.mxu0 0.0
        %1028 = vmatpush1.msra.mxu0 0.0
        %1029 = vmatprep.subr.mxu0 0.0
        %1030 = vmatpush1.msra.mxu0 0.0
        %1031 = vmatprep.subr.mxu0 0.0
        %1032 = vmatpush1.msra.mxu0 %v994
        %1033 = vmatprep.subr.mxu0 0.0
        %1034 = vmatpush1.msra.mxu0 %v992
        %1035 = vmatprep.subr.mxu0 0.0
        %1036 = vmatpush2.msra.mxu0 0.0
        %1037 = vmatprep.subr.mxu0 0.0
        %1038 = vmatpush2.msra.mxu0 0.0
        %1039 = vmatprep.subr.mxu0 0.0
        %1040 = vmatpush2.msra.mxu0 0.0
        %1041 = vmatprep.subr.mxu0 0.0
        %1042 = vmatpush2.msra.mxu0 0.0
        %1043 = vmatprep.subr.mxu0 0.0
        %1044 = vmatpush2.msra.mxu0 0.0
        %1045 = vmatprep.subr.mxu0 0.0
        %1046 = vmatpush2.msra.mxu0 0.0
        %1047 = vmatprep.subr.mxu0 0.0
        %1048 = vmatpush2.msra.mxu0 0.0
        %1049 = vmatprep.subr.mxu0 0.0
        %1050 = vmatpush2.msra.mxu0 0.0
        %1051 = vmatprep.subr.mxu0 0.0
        %1052 = vmatpush2.msra.mxu0 0.0
        %1053 = vmatprep.subr.mxu0 0.0
        %1054 = vmatpush2.msra.mxu0 0.0
        %1055 = vmatprep.subr.mxu0 0.0
        %1056 = vmatpush2.msra.mxu0 0.0
        %1057 = vmatprep.subr.mxu0 0.0
        %1058 = vmatpush2.msra.mxu0 0.0
        %1059 = vmatprep.subr.mxu0 0.0
        %1060 = vmatpush2.msra.mxu0 0.0
        %1061 = vmatprep.subr.mxu0 0.0
        %1062 = vmatpush2.msra.mxu0 0.0
        %1063 = vmatprep.subr.mxu0 0.0
        %1064 = vmatpush2.msra.mxu0 0.0
        %1065 = vmatprep.subr.mxu0 0.0
        %1066 = vmatpush2.msra.mxu0 0.0
        %1067 = vmatprep.mubr.f32.mxu0 0.0
        %1068 = vmatmul.mubr.f32.gmra.mxu0 %v998
        %v1069 = vpop.f32.mrf.mxu0
        %v1070 = vadd.f32 0.0, %v1069
        %v1071 = vpop.f32.mrf.mxu0
        %1072 = vmatprep.mubr.f32.mxu0 0.0
        %1073 = vmatmul.mubr.f32.gmra.mxu0 %v1001
        %v1074 = vpop.f32.mrf.mxu0
        %v1075 = vadd.f32 0.0, %v1074
        %v1076 = vpop.f32.mrf.mxu0
        %1077 = vdwg.mxu0
        %1078 = vrot.lane.b32.xlu0 %v367, 64
        %v1079 = vpop.permute.xlu0 %1078
        %1080 = vrot.lane.b32.xlu0 %v372, 64
        %v1081 = vpop.permute.xlu0 %1080
        %v1085 = vsel %vm265, %v963, 0
        %v1088 = vsel %vm265, %v968, 0
        %1090 = vmatprep.subr.mxu0 0.0
        %1091 = vmatpush1.msra.mxu0 0.0
        %1092 = vmatprep.subr.mxu0 0.0
        %1093 = vmatpush1.msra.mxu0 0.0
        %1094 = vmatprep.subr.mxu0 0.0
        %1095 = vmatpush1.msra.mxu0 0.0
        %1096 = vmatprep.subr.mxu0 0.0
        %1097 = vmatpush1.msra.mxu0 0.0
        %1098 = vmatprep.subr.mxu0 0.0
        %1099 = vmatpush1.msra.mxu0 0.0
        %1100 = vmatprep.subr.mxu0 0.0
        %1101 = vmatpush1.msra.mxu0 0.0
        %1102 = vmatprep.subr.mxu0 0.0
        %1103 = vmatpush1.msra.mxu0 0.0
        %1104 = vmatprep.subr.mxu0 0.0
        %1105 = vmatpush1.msra.mxu0 0.0
        %1106 = vmatprep.subr.mxu0 0.0
        %1107 = vmatpush1.msra.mxu0 0.0
        %1108 = vmatprep.subr.mxu0 0.0
        %1109 = vmatpush1.msra.mxu0 0.0
        %1110 = vmatprep.subr.mxu0 0.0
        %1111 = vmatpush1.msra.mxu0 0.0
        %1112 = vmatprep.subr.mxu0 0.0
        %1113 = vmatpush1.msra.mxu0 0.0
        %1114 = vmatprep.subr.mxu0 0.0
        %1115 = vmatpush1.msra.mxu0 0.0
        %1116 = vmatprep.subr.mxu0 0.0
        %1117 = vmatpush1.msra.mxu0 0.0
        %1118 = vmatprep.subr.mxu0 0.0
        %1119 = vmatpush1.msra.mxu0 %v1081
        %1120 = vmatprep.subr.mxu0 0.0
        %1121 = vmatpush1.msra.mxu0 %v1079
        %1122 = vmatprep.subr.mxu0 0.0
        %1123 = vmatpush2.msra.mxu0 0.0
        %1124 = vmatprep.subr.mxu0 0.0
        %1125 = vmatpush2.msra.mxu0 0.0
        %1126 = vmatprep.subr.mxu0 0.0
        %1127 = vmatpush2.msra.mxu0 0.0
        %1128 = vmatprep.subr.mxu0 0.0
        %1129 = vmatpush2.msra.mxu0 0.0
        %1130 = vmatprep.subr.mxu0 0.0
        %1131 = vmatpush2.msra.mxu0 0.0
        %1132 = vmatprep.subr.mxu0 0.0
        %1133 = vmatpush2.msra.mxu0 0.0
        %1134 = vmatprep.subr.mxu0 0.0
        %1135 = vmatpush2.msra.mxu0 0.0
        %1136 = vmatprep.subr.mxu0 0.0
        %1137 = vmatpush2.msra.mxu0 0.0
        %1138 = vmatprep.subr.mxu0 0.0
        %1139 = vmatpush2.msra.mxu0 0.0
        %1140 = vmatprep.subr.mxu0 0.0
        %1141 = vmatpush2.msra.mxu0 0.0
        %1142 = vmatprep.subr.mxu0 0.0
        %1143 = vmatpush2.msra.mxu0 0.0
        %1144 = vmatprep.subr.mxu0 0.0
        %1145 = vmatpush2.msra.mxu0 0.0
        %1146 = vmatprep.subr.mxu0 0.0
        %1147 = vmatpush2.msra.mxu0 0.0
        %1148 = vmatprep.subr.mxu0 0.0
        %1149 = vmatpush2.msra.mxu0 0.0
        %1150 = vmatprep.subr.mxu0 0.0
        %1151 = vmatpush2.msra.mxu0 0.0
        %1152 = vmatprep.subr.mxu0 0.0
        %1153 = vmatpush2.msra.mxu0 0.0
        %1154 = vmatprep.mubr.f32.mxu0 0.0
        %1155 = vmatmul.mubr.f32.gmra.mxu0 %v1085
        %v1156 = vpop.f32.mrf.mxu0
        %v1157 = vadd.f32 0.0, %v1156
        %v1158 = vpop.f32.mrf.mxu0
        %1159 = vmatprep.mubr.f32.mxu0 0.0
        %1160 = vmatmul.mubr.f32.gmra.mxu0 %v1088
        %v1161 = vpop.f32.mrf.mxu0
        %v1162 = vadd.f32 0.0, %v1161
        %v1163 = vpop.f32.mrf.mxu0
        %1164 = vdwg.mxu0
        %1165 = vrot.lane.b32.xlu0 %v377, 64
        %v1166 = vpop.permute.xlu0 %1165
        %1167 = vrot.lane.b32.xlu0 %v382, 64
        %v1168 = vpop.permute.xlu0 %1167
        %v1172 = vsel %vm265, %v973, 0
        %v1175 = vsel %vm265, %v978, 0
        %1177 = vmatprep.subr.mxu0 0.0
        %1178 = vmatpush1.msra.mxu0 0.0
        %1179 = vmatprep.subr.mxu0 0.0
        %1180 = vmatpush1.msra.mxu0 0.0
        %1181 = vmatprep.subr.mxu0 0.0
        %1182 = vmatpush1.msra.mxu0 0.0
        %1183 = vmatprep.subr.mxu0 0.0
        %1184 = vmatpush1.msra.mxu0 0.0
        %1185 = vmatprep.subr.mxu0 0.0
        %1186 = vmatpush1.msra.mxu0 0.0
        %1187 = vmatprep.subr.mxu0 0.0
        %1188 = vmatpush1.msra.mxu0 0.0
        %1189 = vmatprep.subr.mxu0 0.0
        %1190 = vmatpush1.msra.mxu0 0.0
        %1191 = vmatprep.subr.mxu0 0.0
        %1192 = vmatpush1.msra.mxu0 0.0
        %1193 = vmatprep.subr.mxu0 0.0
        %1194 = vmatpush1.msra.mxu0 0.0
        %1195 = vmatprep.subr.mxu0 0.0
        %1196 = vmatpush1.msra.mxu0 0.0
        %1197 = vmatprep.subr.mxu0 0.0
        %1198 = vmatpush1.msra.mxu0 0.0
        %1199 = vmatprep.subr.mxu0 0.0
        %1200 = vmatpush1.msra.mxu0 0.0
        %1201 = vmatprep.subr.mxu0 0.0
        %1202 = vmatpush1.msra.mxu0 0.0
        %1203 = vmatprep.subr.mxu0 0.0
        %1204 = vmatpush1.msra.mxu0 0.0
        %1205 = vmatprep.subr.mxu0 0.0
        %1206 = vmatpush1.msra.mxu0 %v1168
        %1207 = vmatprep.subr.mxu0 0.0
        %1208 = vmatpush1.msra.mxu0 %v1166
        %1209 = vmatprep.subr.mxu0 0.0
        %1210 = vmatpush2.msra.mxu0 0.0
        %1211 = vmatprep.subr.mxu0 0.0
        %1212 = vmatpush2.msra.mxu0 0.0
        %1213 = vmatprep.subr.mxu0 0.0
        %1214 = vmatpush2.msra.mxu0 0.0
        %1215 = vmatprep.subr.mxu0 0.0
        %1216 = vmatpush2.msra.mxu0 0.0
        %1217 = vmatprep.subr.mxu0 0.0
        %1218 = vmatpush2.msra.mxu0 0.0
        %1219 = vmatprep.subr.mxu0 0.0
        %1220 = vmatpush2.msra.mxu0 0.0
        %1221 = vmatprep.subr.mxu0 0.0
        %1222 = vmatpush2.msra.mxu0 0.0
        %1223 = vmatprep.subr.mxu0 0.0
        %1224 = vmatpush2.msra.mxu0 0.0
        %1225 = vmatprep.subr.mxu0 0.0
        %1226 = vmatpush2.msra.mxu0 0.0
        %1227 = vmatprep.subr.mxu0 0.0
        %1228 = vmatpush2.msra.mxu0 0.0
        %1229 = vmatprep.subr.mxu0 0.0
        %1230 = vmatpush2.msra.mxu0 0.0
        %1231 = vmatprep.subr.mxu0 0.0
        %1232 = vmatpush2.msra.mxu0 0.0
        %1233 = vmatprep.subr.mxu0 0.0
        %1234 = vmatpush2.msra.mxu0 0.0
        %1235 = vmatprep.subr.mxu0 0.0
        %1236 = vmatpush2.msra.mxu0 0.0
        %1237 = vmatprep.subr.mxu0 0.0
        %1238 = vmatpush2.msra.mxu0 0.0
        %1239 = vmatprep.subr.mxu0 0.0
        %1240 = vmatpush2.msra.mxu0 0.0
        %1241 = vmatprep.mubr.f32.mxu0 0.0
        %1242 = vmatmul.mubr.f32.gmra.mxu0 %v1172
        %v1243 = vpop.f32.mrf.mxu0
        %v1244 = vadd.f32 0.0, %v1243
        %v1245 = vpop.f32.mrf.mxu0
        %1246 = vmatprep.mubr.f32.mxu0 0.0
        %1247 = vmatmul.mubr.f32.gmra.mxu0 %v1175
        %v1248 = vpop.f32.mrf.mxu0
        %v1249 = vadd.f32 0.0, %v1248
        %v1250 = vpop.f32.mrf.mxu0
        %1251 = vdwg.mxu0
        %1252 = vrot.lane.b32.xlu0 %v387, 64
        %v1253 = vpop.permute.xlu0 %1252
        %1254 = vrot.lane.b32.xlu0 %v392, 64
        %v1255 = vpop.permute.xlu0 %1254
        %v1259 = vsel %vm265, %v983, 0
        %v1262 = vsel %vm265, %v988, 0
        %1264 = vmatprep.subr.mxu0 0.0
        %1265 = vmatpush1.msra.mxu0 0.0
        %1266 = vmatprep.subr.mxu0 0.0
        %1267 = vmatpush1.msra.mxu0 0.0
        %1268 = vmatprep.subr.mxu0 0.0
        %1269 = vmatpush1.msra.mxu0 0.0
        %1270 = vmatprep.subr.mxu0 0.0
        %1271 = vmatpush1.msra.mxu0 0.0
        %1272 = vmatprep.subr.mxu0 0.0
        %1273 = vmatpush1.msra.mxu0 0.0
        %1274 = vmatprep.subr.mxu0 0.0
        %1275 = vmatpush1.msra.mxu0 0.0
        %1276 = vmatprep.subr.mxu0 0.0
        %1277 = vmatpush1.msra.mxu0 0.0
        %1278 = vmatprep.subr.mxu0 0.0
        %1279 = vmatpush1.msra.mxu0 0.0
        %1280 = vmatprep.subr.mxu0 0.0
        %1281 = vmatpush1.msra.mxu0 0.0
        %1282 = vmatprep.subr.mxu0 0.0
        %1283 = vmatpush1.msra.mxu0 0.0
        %1284 = vmatprep.subr.mxu0 0.0
        %1285 = vmatpush1.msra.mxu0 0.0
        %1286 = vmatprep.subr.mxu0 0.0
        %1287 = vmatpush1.msra.mxu0 0.0
        %1288 = vmatprep.subr.mxu0 0.0
        %1289 = vmatpush1.msra.mxu0 0.0
        %1290 = vmatprep.subr.mxu0 0.0
        %1291 = vmatpush1.msra.mxu0 0.0
        %1292 = vmatprep.subr.mxu0 0.0
        %1293 = vmatpush1.msra.mxu0 %v1255
        %1294 = vmatprep.subr.mxu0 0.0
        %1295 = vmatpush1.msra.mxu0 %v1253
        %1296 = vmatprep.subr.mxu0 0.0
        %1297 = vmatpush2.msra.mxu0 0.0
        %1298 = vmatprep.subr.mxu0 0.0
        %1299 = vmatpush2.msra.mxu0 0.0
        %1300 = vmatprep.subr.mxu0 0.0
        %1301 = vmatpush2.msra.mxu0 0.0
        %1302 = vmatprep.subr.mxu0 0.0
        %1303 = vmatpush2.msra.mxu0 0.0
        %1304 = vmatprep.subr.mxu0 0.0
        %1305 = vmatpush2.msra.mxu0 0.0
        %1306 = vmatprep.subr.mxu0 0.0
        %1307 = vmatpush2.msra.mxu0 0.0
        %1308 = vmatprep.subr.mxu0 0.0
        %1309 = vmatpush2.msra.mxu0 0.0
        %1310 = vmatprep.subr.mxu0 0.0
        %1311 = vmatpush2.msra.mxu0 0.0
        %1312 = vmatprep.subr.mxu0 0.0
        %1313 = vmatpush2.msra.mxu0 0.0
        %1314 = vmatprep.subr.mxu0 0.0
        %1315 = vmatpush2.msra.mxu0 0.0
        %1316 = vmatprep.subr.mxu0 0.0
        %1317 = vmatpush2.msra.mxu0 0.0
        %1318 = vmatprep.subr.mxu0 0.0
        %1319 = vmatpush2.msra.mxu0 0.0
        %1320 = vmatprep.subr.mxu0 0.0
        %1321 = vmatpush2.msra.mxu0 0.0
        %1322 = vmatprep.subr.mxu0 0.0
        %1323 = vmatpush2.msra.mxu0 0.0
        %1324 = vmatprep.subr.mxu0 0.0
        %1325 = vmatpush2.msra.mxu0 0.0
        %1326 = vmatprep.subr.mxu0 0.0
        %1327 = vmatpush2.msra.mxu0 0.0
        %1328 = vmatprep.mubr.f32.mxu0 0.0
        %1329 = vmatmul.mubr.f32.gmra.mxu0 %v1259
        %v1330 = vpop.f32.mrf.mxu0
        %v1331 = vadd.f32 0.0, %v1330
        %v1332 = vpop.f32.mrf.mxu0
        %1333 = vmatprep.mubr.f32.mxu0 0.0
        %1334 = vmatmul.mubr.f32.gmra.mxu0 %v1262
        %v1335 = vpop.f32.mrf.mxu0
        %v1336 = vadd.f32 0.0, %v1335
        %v1337 = vpop.f32.mrf.mxu0
        %1338 = vdwg.mxu0
        %1339 = vst.msk [vmem:[%s245] sm:$0xff] %vm401, %v1070
        %1340 = vst.msk [vmem:[%s245 + $0x8] sm:$0xff] %vm401, %v1075
        %1341 = vst.msk [vmem:[%s245 + $0x10] sm:$0xff] %vm401, %v1157
        %1342 = vst.msk [vmem:[%s245 + $0x18] sm:$0xff] %vm401, %v1162
        %1343 = vst.msk [vmem:[%s245 + $0x20] sm:$0xff] %vm401, %v1244
        %1344 = vst.msk [vmem:[%s245 + $0x28] sm:$0xff] %vm401, %v1249
        %1345 = vst.msk [vmem:[%s245 + $0x30] sm:$0xff] %vm401, %v1331
        %1346 = vst.msk [vmem:[%s245 + $0x38] sm:$0xff] %vm401, %v1336
        %s1347 = sand.u32 %s119, 1
        %s1348 = scalar_lea.sflag [#allocation4], %s1347
        %s1349 = sand.u32 %s119, 1
        %s1350 = smul.addr %s1349, 64
        %s1351 = scalar_lea.vmem [#allocation8], %s1350
        // Predicated region
        $region49: #{tpu_custom_call.1} parent=35 // pred_check
          %p1352 = pneg %p129
        $region50: #{tpu_custom_call.1} parent=35 // pred_check_branch
          %1354 = sbr.rel (%p1352) target = $region52
        $region51: #{tpu_custom_call.1} parent=35 // pred_region
          %s1355 = smul.u32 4, %s22
          %s1357 = ssub.s32 1024, 1024
          %1358 = vsyncadd %s1348, %s1357
          %s1359 = smul.addr %s1355, 2
          %s1360 = smul.addr %s1359, 128
          %s1361 = scalar_lea.hbm %s4, %s1360
          %s1362 = sshll.u32 %s1351, 4
          %s1363 = int_to_ptr.vmem [resolvable:$true] %s1362
          %1368 = dma.vmem_to_hbm [thread:$0]  %s1363, 1024, %s1361, %s1348, 128, 128, 8
        $region52: #{tpu_custom_call.1} parent=35 // pred_fallthru
          _
      $region36: #{tpu_custom_call.1} parent=5 // pred_fallthru
        _
      %p1369 = scmp.le.s32.totalorder 2, %s17
      // Predicated region
      $region53: #{tpu_custom_call.1} parent=5 // pred_check
        %p1370 = pneg %p1369
      $region54: #{tpu_custom_call.1} parent=5 // pred_check_branch
        %1372 = sbr.rel (%p1370) target = $region56
      $region55: #{tpu_custom_call.1} parent=5 // pred_region
        %s1373 = ssub.s32 %s17, 2
        // Predicated region
        $region57: #{tpu_custom_call.1} parent=55 // pred_check
          %p1374 = pneg %p135
        $region58: #{tpu_custom_call.1} parent=55 // pred_check_branch
          %1376 = sbr.rel (%p1374) target = $region60
        $region59: #{tpu_custom_call.1} parent=55 // pred_region
          %s1377 = sand.u32 %s120, 1
          %s1378 = scalar_lea.sflag [#allocation4], %s1377
          %s1379 = sand.u32 %s120, 1
          %s1380 = smul.addr %s1379, 64
          %s1381 = scalar_lea.vmem [#allocation8], %s1380
          %1382 = dma.done %s1378, 1024
        $region60: #{tpu_custom_call.1} parent=55 // pred_fallthru
          _
      $region56: #{tpu_custom_call.1} parent=5 // pred_fallthru
        _
    $region6: #{tpu_custom_call.1} parent=1 // loop_footer
      %s21 = sadd.s32 1, %s17
    $region7: #{tpu_custom_call.1} parent=1 // loop_footer_branch
      %16 = sbr.rel target = $region3
    $region8: #{tpu_custom_call.1} parent=1 // loop_exit
      _
    %1383 = vsyncpa [#allocation3], 1
    %s1384 = scalar_lea.sflag [#allocation3], 1
    %1385 = vsyncpa %s1384, 1
    %1386 = vsyncpa [#allocation6], 1
    %1387 = vsyncpa [#allocation4], 1
    %s1388 = scalar_lea.sflag [#allocation4], 1
    %1389 = vsyncpa %s1388, 1

</llo_original>
